<compile_context>
chip_gen: v5e
topology: v5e:2x2
jax: 0.10.0
libtpu: 0.0.40
codegen_flags: <defaults>
</compile_context>

<pallas_src>
import functools
import math

import jax
import jax.numpy as jnp
import numpy as np
from jax.experimental import pallas as pl
from jax.experimental.pallas import tpu as pltpu

_F32_MIN = float(np.finfo(np.float32).min)   # finite sentinels (avoid inf*0 NaNs
_F32_MAX = float(np.finfo(np.float32).max)   # in the finalize matmul)


def _round_up(x, m):
    return (x + m - 1) // m * m


def _vmem_limit_bytes():
    """Generation-aware scoped-VMEM limit: ~3/4 of physical, capped at 96 MiB.

    v5e/v6e (128 MiB physical) -> 96 MiB; v7x (64 MiB per TensorCore) -> 48 MiB.
    """
    cap = 64 * 1024 * 1024                       # conservative default (v7x)
    try:
        cap = int(pltpu.get_tpu_info().vmem_capacity_bytes)
    except Exception:
        pass
    return max(32 * 1024 * 1024, min(cap * 3 // 4, 96 * 1024 * 1024))


def _choose_tiles(N, M, F, O_pad, x_itemsize, has_mask, budget):
    """Pick (TN, TM) from an honest model of the pipelined VMEM working set.

    Per grid step the pipeline holds (lane dims pad to 128, sublanes to 8):
      2 x X tile      : TN * TM * round_up(F,128) * itemsize  (double buffered)
      2 x mask tile   : TN * TM * 128 * 1   (int8; unit lane dim pads to 128)
      2 x out tile    : TN * O_pad * 4
      2 x beta        : round_up(F,8) * O_pad * 4  (constant index_map, but still
                        double buffered by the default pipeline)
      1 x acc scratch : TN * round_up(F,128) * 4
      (+ bias / count scratch: negligible)
    """
    F_lanes = _round_up(F, 128)
    fixed = 2 * _round_up(F, 8) * O_pad * 4 + 2 * 8 * O_pad * 4   # beta + bias
    avail = max(budget - fixed, 2 * 1024 * 1024)

    # Per (batch row, set element) bytes, double buffered.
    row_bytes = 2 * (F_lanes * x_itemsize + (128 if has_mask else 0))
    # Per batch row, M-independent bytes: output (x2) + accumulator.
    per_n = 2 * O_pad * 4 + F_lanes * 4

    # Set-axis tile: keep the full set per step if even a minimal 8-row batch
    # slab fits; otherwise tile M in multiples of 32 (covers f32/bf16 X packing
    # and the int8 mask packing).
    if 8 * (M * row_bytes + per_n) <= avail:
        TM = M
    else:
        tm_cap = (avail // 8 - per_n) // row_bytes
        TM = max(32, (tm_cap // 32) * 32)

    # Batch-axis tile: as large as the remaining budget allows.
    tn_cap = max(8, (avail // (TM * row_bytes + per_n)) // 8 * 8)
    TN = N if N <= tn_cap else tn_cap
    # v7x megacore: keep >= 2 batch tiles so both TensorCores get work.
    if N >= 16:
        TN = min(TN, _round_up((N + 1) // 2, 8))
    return TN, TM


def _invlinear_kernel(*refs, reduction, use_bias, use_mask, mean_scale):
    # refs = (x, [mask], beta, [bias], y, acc, [cnt])
    it = iter(refs)
    x_ref = next(it)                                     # (TN, TM, F) native dtype
    mask_ref = next(it) if use_mask else None            # (TN, TM, 1) int8
    beta_ref = next(it)                                  # (F, O_pad)  f32
    bias_ref = next(it) if use_bias else None            # (1, O_pad)  f32
    y_ref = next(it)                                     # (TN, O_pad) f32
    acc_ref = next(it)                                   # (TN, F)     f32 scratch
    cnt_ref = next(it) if (use_mask and reduction == "mean") else None  # (TN, 1)

    mj = pl.program_id(1)

    @pl.when(mj == 0)
    def _init():
        if reduction in ("mean", "sum"):
            acc_ref[...] = jnp.zeros(acc_ref.shape, acc_ref.dtype)
        elif reduction == "max":
            acc_ref[...] = jnp.full(acc_ref.shape, _F32_MIN, acc_ref.dtype)
        else:  # "min"
            acc_ref[...] = jnp.full(acc_ref.shape, _F32_MAX, acc_ref.dtype)
        if cnt_ref is not None:
            cnt_ref[...] = jnp.zeros(cnt_ref.shape, cnt_ref.dtype)

    x = x_ref[...].astype(jnp.float32)          # cast after load (rides VPU slack)
    mf = mask_ref[...].astype(jnp.float32) if use_mask else None   # (TN, TM, 1)

    if reduction in ("mean", "sum"):
        z = x * mf if use_mask else x
        acc_ref[...] += jnp.sum(z, axis=1)
        if cnt_ref is not None:
            cnt_ref[...] += jnp.sum(mf, axis=1)
    elif reduction == "max":
        z = jnp.where(mf > 0.5, x, _F32_MIN) if use_mask else x
        acc_ref[...] = jnp.maximum(acc_ref[...], jnp.max(z, axis=1))
    else:  # "min"
        z = jnp.where(mf > 0.5, x, _F32_MAX) if use_mask else x
        acc_ref[...] = jnp.minimum(acc_ref[...], jnp.min(z, axis=1))

    @pl.when(mj == pl.num_programs(1) - 1)
    def _finalize():
        y = jnp.dot(acc_ref[...], beta_ref[...],
                    preferred_element_type=jnp.float32)        # (TN, O_pad)
        if reduction == "mean":
            if use_mask:
                # Count clamped >= 1: empty sets give 0 (+bias), not NaN.
                cnt = jnp.maximum(cnt_ref[...], 1.0)
                y = y * pl.reciprocal(cnt, approx=False)
            else:
                y = y * mean_scale                             # fold 1/M constant
        if use_bias:
            y = y + bias_ref[...]
        y_ref[...] = y.astype(y_ref.dtype)


def inv_linear(X, mask, beta, bias, *, reduction="mean"):
    """Pallas implementation of InvLinear.forward.

    X:    (N, M, F) float32 or bfloat16
    mask: (N, M) binary (1/True = valid) or None
    beta: (F, O)
    bias: (1, O) or None
    returns (N, O) float32
    """
    assert reduction in ("mean", "sum", "max", "min")
    N, M, F = X.shape
    O = beta.shape[1]
    O_pad = _round_up(O, 128)

    # Stream X in its native dtype (f32 / bf16); everything else falls back to f32.
    if X.dtype not in (jnp.float32, jnp.bfloat16):
        X = X.astype(jnp.float32)
    x_itemsize = X.dtype.itemsize

    use_mask = mask is not None
    use_bias = bias is not None

    vmem_limit = _vmem_limit_bytes()
    TN, TM = _choose_tiles(N, M, F, O_pad, x_itemsize, use_mask,
                           budget=vmem_limit - (8 << 20))

    # Pad the set axis so every M tile is full.
    M_pad = _round_up(M, TM)
    if M_pad != M:
        if use_mask or reduction in ("mean", "sum"):
            pad_val = 0.0            # masked out / contributes 0 to the sum
        elif reduction == "max":
            pad_val = float(jnp.finfo(X.dtype).min)
        else:
            pad_val = float(jnp.finfo(X.dtype).max)
        X = jnp.pad(X, ((0, 0), (0, M_pad - M), (0, 0)), constant_values=pad_val)

    inputs = [X]
    in_specs = [pl.BlockSpec((TN, TM, F), lambda i, j: (i, j, 0))]

    if use_mask:
        mask_i8 = mask.astype(jnp.int8)
        if M_pad != M:
            mask_i8 = jnp.pad(mask_i8, ((0, 0), (0, M_pad - M)))
        # Set axis on sublanes, singleton lane dim: the broadcast over F inside
        # the kernel is a lane splat; int8 keeps the lane-padded VMEM tile and
        # the HBM stream 4x smaller than f32.
        inputs.append(mask_i8[:, :, None])
        in_specs.append(pl.BlockSpec((TN, TM, 1), lambda i, j: (i, j, 0)))

    beta_p = beta.astype(jnp.float32)
    if O_pad != O:
        beta_p = jnp.pad(beta_p, ((0, 0), (0, O_pad - O)))
    inputs.append(beta_p)
    in_specs.append(pl.BlockSpec((F, O_pad), lambda i, j: (0, 0)))

    if use_bias:
        bias_p = jnp.asarray(bias, jnp.float32).reshape(1, O)
        if O_pad != O:
            bias_p = jnp.pad(bias_p, ((0, 0), (0, O_pad - O)))
        inputs.append(bias_p)
        in_specs.append(pl.BlockSpec((1, O_pad), lambda i, j: (0, 0)))

    scratch_shapes = [pltpu.VMEM((TN, F), jnp.float32)]
    if use_mask and reduction == "mean":
        scratch_shapes.append(pltpu.VMEM((TN, 1), jnp.float32))

    kernel = functools.partial(
        _invlinear_kernel, reduction=reduction, use_bias=use_bias,
        use_mask=use_mask, mean_scale=1.0 / M)

    out = pl.pallas_call(
        kernel,
        out_shape=jax.ShapeDtypeStruct((N, O_pad), jnp.float32),
        grid_spec=pltpu.PrefetchScalarGridSpec(
            num_scalar_prefetch=0,
            grid=(pl.cdiv(N, TN), M_pad // TM),
            in_specs=in_specs,
            out_specs=pl.BlockSpec((TN, O_pad), lambda i, j: (i, 0)),
            scratch_shapes=scratch_shapes,
        ),
        compiler_params=pltpu.CompilerParams(
            dimension_semantics=("parallel", "arbitrary"),
            vmem_limit_bytes=vmem_limit),
    )(*inputs)

    return out[:, :O] if O_pad != O else out


def _reference(X, mask, beta, bias, reduction):
    X = X.astype(jnp.float32)
    if mask is None:
        mask = jnp.ones(X.shape[:2], dtype=jnp.float32)
    m = mask.astype(jnp.float32)
    if reduction in ("mean", "sum"):
        s = jnp.sum(X * m[:, :, None], axis=1)
    elif reduction == "max":
        s = jnp.max(jnp.where(m[:, :, None] > 0.5, X, -jnp.inf), axis=1)
    else:
        s = jnp.min(jnp.where(m[:, :, None] > 0.5, X, jnp.inf), axis=1)
    y = jnp.dot(s, beta, precision=jax.lax.Precision.HIGHEST)
    if reduction == "mean":
        y = y / jnp.sum(m, axis=1, keepdims=True)
    if bias is not None:
        y = y + bias
    return y


if __name__ == "__main__":
    # Small shapes consistent with the module: N sets of at most M elements,
    # each element of dimension in_features.
    N, M = 2, 8
    in_features, out_features = 32, 16

    key = jax.random.PRNGKey(0)
    kx, kmask, kbeta, kbias = jax.random.split(key, 4)

    X = jax.random.normal(kx, (N, M, in_features), dtype=jnp.float32)

    # Binary mask with at least one valid element per set.
    mask_bool = jax.random.bernoulli(kmask, p=0.7, shape=(N, M))
    mask_bool = mask_bool.at[:, 0].set(True)
    mask = mask_bool.astype(jnp.float32)

    # Deterministic parameter init mirroring reset_parameters():
    #   beta: xavier_uniform_  -> U(-a, a), a = sqrt(6 / (fan_in + fan_out))
    #   bias: U(-b, b), b = 1 / sqrt(fan_in)   (fan_in = in_features)
    a = math.sqrt(6.0 / (in_features + out_features))
    beta = jax.random.uniform(kbeta, (in_features, out_features),
                              minval=-a, maxval=a, dtype=jnp.float32)
    b = 1.0 / math.sqrt(in_features)
    bias = jax.random.uniform(kbias, (1, out_features),
                              minval=-b, maxval=b, dtype=jnp.float32)

    X_bf16 = X.astype(jnp.bfloat16)

    configs = [
        ("mean", X, mask, bias),
        ("sum", X, mask, bias),
        ("max", X, mask, None),
        ("min", X, mask, None),
        ("mean", X, None, bias),        # mask-free fast path (no mask stream)
        ("sum", X_bf16, mask, bias),    # native-bf16 X streaming path
    ]
    for reduction, x_in, msk, bs in configs:
        y = inv_linear(x_in, msk, beta, bs, reduction=reduction)
        y = jax.block_until_ready(y)
        y_ref = _reference(x_in, msk, beta, bs, reduction)
        np.testing.assert_allclose(np.asarray(y), np.asarray(y_ref),
                                   rtol=2e-5, atol=2e-5)

    print("KERNEL_OK")
</pallas_src>

<mosaic_0001>
module attributes {stable_mosaic.version = 11 : i64} {
  func.func @_invlinear_kernel(%arg0: i32, %arg1: i32, %arg2: memref<2x8x32xf32, #tpu.memory_space<vmem>>, %arg3: memref<2x8x1xi8, #tpu.memory_space<vmem>>, %arg4: memref<32x128xf32, #tpu.memory_space<vmem>>, %arg5: memref<1x128xf32, #tpu.memory_space<vmem>>, %arg6: memref<2x128xf32, #tpu.memory_space<vmem>>, %arg7: memref<2x32xf32, #tpu.memory_space<vmem>>, %arg8: memref<2x1xf32, #tpu.memory_space<vmem>>) attributes {dimension_semantics = [#tpu.dimension_semantics<parallel>, #tpu.dimension_semantics<arbitrary>], iteration_bounds = array<i64: 1, 1>, scalar_prefetch = 0 : i64, scratch_operands = 2 : i64, tpu.core_type = #tpu.core_type<tc>, window_params = [{transform_indices = @transform_0, window_bounds = array<i64: 2, 8, 32>}, {transform_indices = @transform_1, window_bounds = array<i64: 2, 8, 1>}, {pipeline_mode = #tpu.pipeline_mode<synchronous>, transform_indices = @transform_2, window_bounds = array<i64: 32, 128>}, {pipeline_mode = #tpu.pipeline_mode<synchronous>, transform_indices = @transform_3, window_bounds = array<i64: 1, 128>}, {transform_indices = @transform_4, window_bounds = array<i64: 2, 128>}]} {
    %c0_i32 = arith.constant 0 : i32
    %0 = arith.cmpi eq, %arg1, %c0_i32 : i32
    %1 = arith.extui %0 : i1 to i32
    %c0_i32_0 = arith.constant 0 : i32
    %2 = arith.cmpi ne, %1, %c0_i32_0 : i32
    scf.if %2 {
      %cst_17 = arith.constant 0.000000e+00 : f32
      %19 = vector.broadcast %cst_17 : f32 to vector<2x32xf32>
      %c0_18 = arith.constant 0 : index
      %c0_19 = arith.constant 0 : index
      %20 = vector.load %arg7[%c0_18, %c0_19] : memref<2x32xf32, #tpu.memory_space<vmem>>, vector<2x32xf32>
      tpu.vector_store %arg7[%c0_18, %c0_19], %19 {strides = array<i32>} : memref<2x32xf32, #tpu.memory_space<vmem>>, vector<2x32xf32>,
      %cst_20 = arith.constant 0.000000e+00 : f32
      %21 = vector.broadcast %cst_20 : f32 to vector<2x1xf32>
      %c0_21 = arith.constant 0 : index
      %c0_22 = arith.constant 0 : index
      %22 = vector.load %arg8[%c0_21, %c0_22] : memref<2x1xf32, #tpu.memory_space<vmem>>, vector<2x1xf32>
      tpu.vector_store %arg8[%c0_21, %c0_22], %21 {strides = array<i32>} : memref<2x1xf32, #tpu.memory_space<vmem>>, vector<2x1xf32>,
    } else {
    }
    %c0 = arith.constant 0 : index
    %c0_1 = arith.constant 0 : index
    %c0_2 = arith.constant 0 : index
    %3 = vector.load %arg2[%c0, %c0_1, %c0_2] : memref<2x8x32xf32, #tpu.memory_space<vmem>>, vector<2x8x32xf32>
    %c0_3 = arith.constant 0 : index
    %c0_4 = arith.constant 0 : index
    %c0_5 = arith.constant 0 : index
    %4 = vector.load %arg3[%c0_3, %c0_4, %c0_5] : memref<2x8x1xi8, #tpu.memory_space<vmem>>, vector<2x8x1xi8>
    %5 = arith.sitofp %4 : vector<2x8x1xi8> to vector<2x8x1xf32>
    %6 = vector.broadcast %5 : vector<2x8x1xf32> to vector<2x8x32xf32>
    %7 = arith.mulf %3, %6 : vector<2x8x32xf32>
    %c0_6 = arith.constant 0 : index
    %c0_7 = arith.constant 0 : index
    %8 = vector.load %arg7[%c0_6, %c0_7] : memref<2x32xf32, #tpu.memory_space<vmem>>, vector<2x32xf32>
    %cst = arith.constant dense<0.000000e+00> : vector<2x32xf32>
    %9 = vector.multi_reduction <add>, %7, %cst [1] : vector<2x8x32xf32> to vector<2x32xf32>
    %10 = arith.addf %8, %9 : vector<2x32xf32>
    %c0_8 = arith.constant 0 : index
    %c0_9 = arith.constant 0 : index
    %11 = vector.load %arg7[%c0_8, %c0_9] : memref<2x32xf32, #tpu.memory_space<vmem>>, vector<2x32xf32>
    tpu.vector_store %arg7[%c0_8, %c0_9], %10 {strides = array<i32>} : memref<2x32xf32, #tpu.memory_space<vmem>>, vector<2x32xf32>,
    %c0_10 = arith.constant 0 : index
    %c0_11 = arith.constant 0 : index
    %12 = vector.load %arg8[%c0_10, %c0_11] : memref<2x1xf32, #tpu.memory_space<vmem>>, vector<2x1xf32>
    %cst_12 = arith.constant dense<0.000000e+00> : vector<2x1xf32>
    %13 = vector.multi_reduction <add>, %5, %cst_12 [1] : vector<2x8x1xf32> to vector<2x1xf32>
    %14 = arith.addf %12, %13 : vector<2x1xf32>
    %c0_13 = arith.constant 0 : index
    %c0_14 = arith.constant 0 : index
    %15 = vector.load %arg8[%c0_13, %c0_14] : memref<2x1xf32, #tpu.memory_space<vmem>>, vector<2x1xf32>
    tpu.vector_store %arg8[%c0_13, %c0_14], %14 {strides = array<i32>} : memref<2x1xf32, #tpu.memory_space<vmem>>, vector<2x1xf32>,
    %c0_i32_15 = arith.constant 0 : i32
    %16 = arith.cmpi eq, %arg1, %c0_i32_15 : i32
    %17 = arith.extui %16 : i1 to i32
    %c0_i32_16 = arith.constant 0 : i32
    %18 = arith.cmpi ne, %17, %c0_i32_16 : i32
    scf.if %18 {
      %c0_17 = arith.constant 0 : index
      %c0_18 = arith.constant 0 : index
      %19 = vector.load %arg7[%c0_17, %c0_18] : memref<2x32xf32, #tpu.memory_space<vmem>>, vector<2x32xf32>
      %c0_19 = arith.constant 0 : index
      %c0_20 = arith.constant 0 : index
      %20 = vector.load %arg4[%c0_19, %c0_20] : memref<32x128xf32, #tpu.memory_space<vmem>>, vector<32x128xf32>
      %cst_21 = arith.constant dense<0.000000e+00> : vector<2x128xf32>
      %21 = tpu.matmul %19, %20, %cst_21 {dimension_numbers = #tpu.dot_dimension_numbers<[1], [0], [0], [1], [0, 0, 1, 1], [], []>} : vector<2x32xf32>, vector<32x128xf32>, vector<2x128xf32> -> vector<2x128xf32>
      %c0_22 = arith.constant 0 : index
      %c0_23 = arith.constant 0 : index
      %22 = vector.load %arg8[%c0_22, %c0_23] : memref<2x1xf32, #tpu.memory_space<vmem>>, vector<2x1xf32>
      %cst_24 = arith.constant 1.000000e+00 : f32
      %23 = vector.broadcast %cst_24 : f32 to vector<2x1xf32>
      %24 = arith.maximumf %22, %23 : vector<2x1xf32>
      %25 = tpu.reciprocal %24 : vector<2x1xf32> -> vector<2x1xf32>
      %26 = vector.broadcast %25 : vector<2x1xf32> to vector<2x128xf32>
      %27 = arith.mulf %21, %26 : vector<2x128xf32>
      %c0_25 = arith.constant 0 : index
      %c0_26 = arith.constant 0 : index
      %28 = vector.load %arg5[%c0_25, %c0_26] : memref<1x128xf32, #tpu.memory_space<vmem>>, vector<1x128xf32>
      %29 = vector.broadcast %28 : vector<1x128xf32> to vector<2x128xf32>
      %30 = arith.addf %27, %29 : vector<2x128xf32>
      %c0_27 = arith.constant 0 : index
      %c0_28 = arith.constant 0 : index
      %31 = vector.load %arg6[%c0_27, %c0_28] : memref<2x128xf32, #tpu.memory_space<vmem>>, vector<2x128xf32>
      tpu.vector_store %arg6[%c0_27, %c0_28], %30 {strides = array<i32>} : memref<2x128xf32, #tpu.memory_space<vmem>>, vector<2x128xf32>,
    } else {
    }
    return
  }
  func.func @transform_0(%arg0: i32, %arg1: i32) -> (i32, i32, i32) {
    %c0_i32 = arith.constant 0 : i32
    %c0_i32_0 = arith.constant 0 : i32
    return %arg0, %arg1, %c0_i32 : i32, i32, i32
  }
  func.func @transform_1(%arg0: i32, %arg1: i32) -> (i32, i32, i32) {
    %c0_i32 = arith.constant 0 : i32
    %c0_i32_0 = arith.constant 0 : i32
    return %arg0, %arg1, %c0_i32 : i32, i32, i32
  }
  func.func @transform_2(%arg0: i32, %arg1: i32) -> (i32, i32) {
    %c0_i32 = arith.constant 0 : i32
    %c0_i32_0 = arith.constant 0 : i32
    %c0_i32_1 = arith.constant 0 : i32
    return %c0_i32, %c0_i32_0 : i32, i32
  }
  func.func @transform_3(%arg0: i32, %arg1: i32) -> (i32, i32) {
    %c0_i32 = arith.constant 0 : i32
    %c0_i32_0 = arith.constant 0 : i32
    %c0_i32_1 = arith.constant 0 : i32
    return %c0_i32, %c0_i32_0 : i32, i32
  }
  func.func @transform_4(%arg0: i32, %arg1: i32) -> (i32, i32) {
    %c0_i32 = arith.constant 0 : i32
    %c0_i32_0 = arith.constant 0 : i32
    return %arg0, %c0_i32 : i32, i32
  }
}

</mosaic_0001>

<llo_original>
// kernel: tpu_custom_call.1
$region0: #{tpu_custom_call.1}
  #allocation0 [shape = 'u32[]', space=smem, size = 0x4, offset = 0x4, fixed_abs, tag = 'smem constant byte address 0x4 - core index']
  #allocation1 [shape = 'u32[72,128]{1,0:T(1,128)}', space=vmem, size = 0x9000, scoped, tag = 'internal scratch']
  #allocation2 [shape = 'f32[2,32]{1,0:T(2,128)}', space=vmem, size = 0x400, scoped, tag = 'scratch operand']
  #allocation3 [shape = 'f32[2,1]{1,0:T(2,128)}', space=vmem, size = 0x400, scoped, tag = 'scratch operand']
  %s0 = inlined_call_operand.hbm [shape: f32[2,8,32], index: 0, kind: input, shape index: {}]
  %s1 = inlined_call_operand.vmem [shape: s8[2,8,1], index: 1, kind: input, shape index: {}]
  %s2 = inlined_call_operand.hbm [shape: f32[32,128], index: 2, kind: input, shape index: {}]
  %s3 = inlined_call_operand.vmem [shape: f32[1,128], index: 3, kind: input, shape index: {}]
  %s4 = inlined_call_operand.hbm [shape: f32[2,128], index: 4, kind: output, shape index: {}]
  %s5 = sld [smem:[#allocation0]]
  $region42: #{tpu_custom_call.1} parent=0
    _
  %s7 = ssub.s32 1, %s5
  %s8 = scalar_select 0, %s7, %s5
  $region1: #{tpu_custom_call.1} parent=0
    #allocation4 [shape = 'u8[8192]{0}', space=vmem, size = 0x2000, scoped, tag = 'input window, operand 0, single buffered']
    #allocation5 [shape = 's32[1]{0}', space=sflag, size = 0x4, scoped, tag = 'scoped memory for tpu_custom_call.1']
    #allocation6 [shape = 's32[1]{0}', space=sflag, size = 0x4, scoped, tag = 'scoped memory for tpu_custom_call.1']
    #allocation7 [shape = 'u8[16384]{0}', space=vmem, size = 0x4000, scoped, tag = 'input window, operand 2, single buffered']
    #allocation8 [shape = 's32[1]{0}', space=sflag, size = 0x4, scoped, tag = 'scoped memory for tpu_custom_call.1']
    #allocation9 [shape = 'u8[1024]{0}', space=vmem, size = 0x400, scoped, tag = 'output window, operand 0, single buffered']
    %9 = vsyncpa [#allocation5], 0
    %10 = vsyncpa [#allocation8], 0
    %11 = vsyncpa [#allocation6], 0
    // Predicated region
    $region2: #{tpu_custom_call.1} parent=1 // pred_check
      _
    $region3: #{tpu_custom_call.1} parent=1 // pred_check_branch
      %13 = sbr.rel (0) target = $region5
    $region4: #{tpu_custom_call.1} parent=1 // pred_region
      %15 = vsyncadd [#allocation5], 0
      %s16 = sshll.u32 %s0, 4
      %s17 = int_to_ptr.hbm [resolvable:$true] %s16
      %s18 = sshll.u32 [#allocation4], 4
      %s19 = int_to_ptr.vmem [resolvable:$true] %s18
      %24 = dma.hbm_to_vmem [thread:$0]  %s17, 256, %s19, [#allocation5], 128, 128, 8
    $region5: #{tpu_custom_call.1} parent=1 // pred_fallthru
      _
    // Predicated region
    $region6: #{tpu_custom_call.1} parent=1 // pred_check
      _
    $region7: #{tpu_custom_call.1} parent=1 // pred_check_branch
      %26 = sbr.rel (0) target = $region9
    $region8: #{tpu_custom_call.1} parent=1 // pred_region
      _
    $region9: #{tpu_custom_call.1} parent=1 // pred_fallthru
      _
    // Predicated region
    $region10: #{tpu_custom_call.1} parent=1 // pred_check
      _
    $region11: #{tpu_custom_call.1} parent=1 // pred_check_branch
      %28 = sbr.rel (0) target = $region13
    $region12: #{tpu_custom_call.1} parent=1 // pred_region
      %30 = vsyncadd [#allocation8], 0
      %s31 = sshll.u32 %s2, 4
      %s32 = int_to_ptr.hbm [resolvable:$true] %s31
      %s33 = sshll.u32 [#allocation7], 4
      %s34 = int_to_ptr.vmem [resolvable:$true] %s33
      %39 = dma.hbm_to_vmem [thread:$0]  %s32, 512, %s34, [#allocation8], 128, 128, 8
    $region13: #{tpu_custom_call.1} parent=1 // pred_fallthru
      _
    // Predicated region
    $region14: #{tpu_custom_call.1} parent=1 // pred_check
      _
    $region15: #{tpu_custom_call.1} parent=1 // pred_check_branch
      %41 = sbr.rel (0) target = $region17
    $region16: #{tpu_custom_call.1} parent=1 // pred_region
      _
    $region17: #{tpu_custom_call.1} parent=1 // pred_fallthru
      _
    // Predicated region
    $region18: #{tpu_custom_call.1} parent=1 // pred_check
      _
    $region19: #{tpu_custom_call.1} parent=1 // pred_check_branch
      %43 = sbr.rel (0) target = $region21
    $region20: #{tpu_custom_call.1} parent=1 // pred_region
      %45 = dma.done [#allocation5], 256
    $region21: #{tpu_custom_call.1} parent=1 // pred_fallthru
      _
    // Predicated region
    $region22: #{tpu_custom_call.1} parent=1 // pred_check
      _
    $region23: #{tpu_custom_call.1} parent=1 // pred_check_branch
      %47 = sbr.rel (0) target = $region25
    $region24: #{tpu_custom_call.1} parent=1 // pred_region
      %49 = dma.done [#allocation8], 512
    $region25: #{tpu_custom_call.1} parent=1 // pred_fallthru
      _
    %p50 = scmp.eq.s32.totalorder 0, 0
    // Predicated region
    $region26: #{tpu_custom_call.1} parent=1 // pred_check
      %p51 = pneg %p50
    $region27: #{tpu_custom_call.1} parent=1 // pred_check_branch
      %53 = sbr.rel (%p51) target = $region29
    $region28: #{tpu_custom_call.1} parent=1 // pred_region
      %vm54 = vcmask 254976
      %55 = vst.msk [vmem:[#allocation2] sm:$0x3] %vm54, 0.0
      %vm56 = vcmask 1024
      %57 = vst.msk [vmem:[#allocation3] sm:$0x3] %vm56, 0.0
    $region29: #{tpu_custom_call.1} parent=1 // pred_fallthru
      _
    %v58 = vld [vmem:[#allocation4] sm:$0xff]
    %v59 = vld [vmem:[#allocation4 + $0x8] sm:$0xff]
    %v60 = vld [vmem:[%s1] sm:$0x3]
    %v61 = vld [vmem:[%s1 + $0x2] sm:$0x3]
    %v62 = vunpack.c.0.s8 %v60
    %v63 = vunpack.c.0.s8 %v61
    %v64 = vcvt.s32.f32 %v62
    %v65 = vcvt.s32.f32 %v63
    %67 = vset.pattern.permute.xlu0 0
    %68 = vperm.xlu0 %67, %v64
    %v69 = vpop.permute.xlu0 %68
    %72 = vset.pattern.permute.xlu0 0
    %73 = vperm.xlu0 %72, %v65
    %v74 = vpop.permute.xlu0 %73
    %v76 = vmul.f32 %v58, %v69
    %v77 = vmul.f32 %v59, %v74
    %v78 = vld [vmem:[#allocation2] sm:$0x3]
    %vm79 = vcmask 261120
    %v80 = vsel %vm79, %v76, 0.0
    %v81 = vrot.slane %v80, 4
    %v82 = vadd.f32 %v80, %v81
    %v83 = vrot.slane %v82, 2
    %v84 = vadd.f32 %v82, %v83
    %v85 = vrot.slane %v84, 1
    %v86 = vadd.f32 %v84, %v85
    %v87 = vsel %vm79, %v77, 0.0
    %v88 = vrot.slane %v87, 4
    %v89 = vadd.f32 %v87, %v88
    %v90 = vrot.slane %v89, 2
    %v91 = vadd.f32 %v89, %v90
    %v92 = vrot.slane %v91, 1
    %v93 = vadd.f32 %v91, %v92
    %vm96 = vcmask 1041409
    %v97 = vsel %vm96, %v93, %v86
    %v99 = vadd.f32 %v78, %v97
    %vm100 = vcmask 254976
    %101 = vst.msk [vmem:[#allocation2] sm:$0x3] %vm100, %v99
    %v102 = vld [vmem:[#allocation3] sm:$0x3]
    %vm103 = vcmask 7168
    %v104 = vsel %vm103, %v64, 0.0
    %v105 = vrot.slane %v104, 4
    %v106 = vadd.f32 %v104, %v105
    %v107 = vrot.slane %v106, 2
    %v108 = vadd.f32 %v106, %v107
    %v109 = vrot.slane %v108, 1
    %v110 = vadd.f32 %v108, %v109
    %v111 = vsel %vm103, %v65, 0.0
    %v112 = vrot.slane %v111, 4
    %v113 = vadd.f32 %v111, %v112
    %v114 = vrot.slane %v113, 2
    %v115 = vadd.f32 %v113, %v114
    %v116 = vrot.slane %v115, 1
    %v117 = vadd.f32 %v115, %v116
    %v120 = vsel %vm96, %v117, %v110
    %v122 = vadd.f32 %v102, %v120
    %vm123 = vcmask 1024
    %124 = vst.msk [vmem:[#allocation3] sm:$0x3] %vm123, %v122
    // Predicated region
    $region30: #{tpu_custom_call.1} parent=1 // pred_check
      %p125 = pneg %p50
    $region31: #{tpu_custom_call.1} parent=1 // pred_check_branch
      %127 = sbr.rel (%p125) target = $region33
    $region32: #{tpu_custom_call.1} parent=1 // pred_region
      %v128 = vld [vmem:[#allocation2] sm:$0x3]
      %v129 = vld [vmem:[#allocation7] sm:$0xff]
      %v130 = vld [vmem:[#allocation7 + $0x8] sm:$0xff]
      %v131 = vld [vmem:[#allocation7 + $0x10] sm:$0xff]
      %v132 = vld [vmem:[#allocation7 + $0x18] sm:$0xff]
      %v134 = vsel %vm79, %v128, 0
      %136 = vmatpush.msra.mxu0 0.0
      %137 = vmatpush.msra.mxu0 0.0
      %138 = vmatpush.msra.mxu0 0.0
      %139 = vmatpush.msra.mxu0 0.0
      %140 = vmatpush.msra.mxu0 0.0
      %141 = vmatpush.msra.mxu0 0.0
      %142 = vmatpush.msra.mxu0 0.0
      %143 = vmatpush.msra.mxu0 0.0
      %144 = vmatpush.msra.mxu0 0.0
      %145 = vmatpush.msra.mxu0 0.0
      %146 = vmatpush.msra.mxu0 0.0
      %147 = vmatpush.msra.mxu0 0.0
      %148 = vmatpush.msra.mxu0 %v132
      %149 = vmatpush.msra.mxu0 %v131
      %150 = vmatpush.msra.mxu0 %v130
      %151 = vmatpush.msra.mxu0 %v129
      %152 = vmatmul.f32.gmra.mxu0 %v134
      %v153 = vpop.f32.mrf.mxu0
      %v154 = vadd.f32 0.0, %v153
      %155 = vdwg.mxu0
      %v156 = vld [vmem:[#allocation3] sm:$0x3]
      %v157 = vmax.f32 %v156, 1.0
      %v158 = vrcp.pop %v157
      %v159 = vmul.f32 %v157, %v158
      %v160 = vsub.f32 1.0, %v159
      %v161 = vmul.f32 %v158, %v160
      %v162 = vadd.f32 %v158, %v161
      %vm163 = vweird.f32 %v157
      %vm164 = vweird.f32 %v158
      %vm165 = vmor %vm163, %vm164
      %v166 = vsel %vm165, %v158, %v162
      %v167 = vand.u32 2147483647, %v157
      %vm168 = vcmp.eq.f32.partialorder %v167, 8.507059e+37
      %v169 = vand.u32 %v157, 2147483648
      %v170 = vor.u32 1.1754944e-38, %v169
      %v171 = vsel %vm168, %v170, %v166
      %173 = vset.pattern.permute.xlu0 0
      %174 = vperm.xlu0 %173, %v171
      %v175 = vpop.permute.xlu0 %174
      %v177 = vmul.f32 %v154, %v175
      %v178 = vld [vmem:[%s3] sm:$0x1]
      %v180 = vperm.slane %v178, 0
      %v182 = vadd.f32 %v177, %v180
      %183 = vst [vmem:[#allocation9] sm:$0x3] %v182
    $region33: #{tpu_custom_call.1} parent=1 // pred_fallthru
      _
    // Predicated region
    $region34: #{tpu_custom_call.1} parent=1 // pred_check
      _
    $region35: #{tpu_custom_call.1} parent=1 // pred_check_branch
      %185 = sbr.rel (0) target = $region37
    $region36: #{tpu_custom_call.1} parent=1 // pred_region
      %187 = vsyncadd [#allocation6], 0
      %s189 = sshll.u32 [#allocation9], 4
      %s190 = int_to_ptr.vmem [resolvable:$true] %s189
      %s191 = sshll.u32 %s4, 4
      %s192 = int_to_ptr.hbm [resolvable:$true] %s191
      %194 = dma.vmem_to_hbm [thread:$0]  %s190, 32, %s192, [#allocation6]
    $region37: #{tpu_custom_call.1} parent=1 // pred_fallthru
      _
    // Predicated region
    $region38: #{tpu_custom_call.1} parent=1 // pred_check
      _
    $region39: #{tpu_custom_call.1} parent=1 // pred_check_branch
      %196 = sbr.rel (0) target = $region41
    $region40: #{tpu_custom_call.1} parent=1 // pred_region
      %198 = dma.done [#allocation6], 32
    $region41: #{tpu_custom_call.1} parent=1 // pred_fallthru
      _
    %199 = vsyncpa [#allocation5], 1
    %200 = vsyncpa [#allocation8], 1
    %201 = vsyncpa [#allocation6], 1

</llo_original>
